<compile_context>
chip_gen: v7x
topology: tpu7x:2x2x1
jax: 0.10.0
libtpu: 0.0.40
codegen_flags: <defaults>
</compile_context>

<pallas_src>
import jax
import jax.numpy as jnp
from jax.experimental import pallas as pl
from jax.experimental.pallas import tpu as pltpu


_TB_MAX = 16384          # max batch-tile width (lanes) -> ~2 MiB HBM traffic / step
_TARGET_GRID_STEPS = 4   # >= 4 tiles so v7x's two TensorCores both get work


def _round_up(n, m):
    return ((n + m - 1) // m) * m


def _cdiv(a, b):
    return -(-a // b)


def _choose_batch_tile(batch):
    """Pick (tile_width, padded_batch): lane-aligned, <= _TB_MAX, ~>=4 steps."""
    b0 = _round_up(max(batch, 1), 128)                 # lane alignment
    steps = max(_TARGET_GRID_STEPS, _cdiv(b0, _TB_MAX))
    tb = _round_up(_cdiv(b0, steps), 128)
    tb = max(128, min(_TB_MAX, tb))
    b_pad = _round_up(b0, tb)
    return tb, b_pad


def _mcn_kernel(xT_ref, w1_ref, b1_ref, wh_ref, bh_ref, out_ref):
    # Batch sits on the 128-lane axis -> lane-dense loads/compute/stores.
    #   h   = relu(W1 @ x^T + b1)      : (16, TB)
    #   out = W_heads @ h + b_heads    : (24, TB)   (fcO / fcOmega / fcTheta fused)
    h = jnp.dot(w1_ref[...], xT_ref[...],
                preferred_element_type=jnp.float32) + b1_ref[...]
    h = jnp.maximum(h, 0.0)  # ReLU
    out_ref[...] = (jnp.dot(wh_ref[...], h,
                            preferred_element_type=jnp.float32)
                    + bh_ref[...]).astype(out_ref.dtype)


@jax.jit
def multi_complexity_net(x, params):
    """Returns (out_O, out_omega, out_theta), each of shape (B, 8)."""
    B = x.shape[0]

    # Fuse the three heads: (24, 16) weight, (24,) bias (PyTorch (out, in) layout).
    wh = jnp.concatenate([params["wO"], params["wOm"], params["wTh"]], axis=0)
    bh = jnp.concatenate([params["bO"], params["bOm"], params["bTh"]], axis=0)

    tb, b_pad = _choose_batch_tile(B)

    # Feature-major layout: batch on the lane axis; pad only the tail tile.
    xT = x.T.astype(jnp.float32)
    if b_pad != B:
        xT = jnp.pad(xT, ((0, 0), (0, b_pad - B)))

    grid = (b_pad // tb,)
    flops = 2 * b_pad * (8 * 16 + 16 * 24)
    bytes_accessed = b_pad * (8 + 24) * 4 + (16 * 8 + 16 + 24 * 16 + 24) * 4

    out = pl.pallas_call(
        _mcn_kernel,
        out_shape=jax.ShapeDtypeStruct((24, b_pad), jnp.float32),
        grid=grid,
        in_specs=[
            pl.BlockSpec((8, tb), lambda i: (0, i)),     # x^T batch tile
            pl.BlockSpec((16, 8), lambda i: (0, 0)),     # W1      (resident)
            pl.BlockSpec((16, 1), lambda i: (0, 0)),     # b1      (resident)
            pl.BlockSpec((24, 16), lambda i: (0, 0)),    # W_heads (resident)
            pl.BlockSpec((24, 1), lambda i: (0, 0)),     # b_heads (resident)
        ],
        out_specs=pl.BlockSpec((24, tb), lambda i: (0, i)),
        compiler_params=pltpu.CompilerParams(
            dimension_semantics=("parallel",),
            vmem_limit_bytes=32 * 1024 * 1024),
        cost_estimate=pl.CostEstimate(flops=flops, transcendentals=0,
                                      bytes_accessed=bytes_accessed),
    )(xT,
      params["w1"], params["b1"].reshape(16, 1),
      wh, bh.reshape(24, 1))

    # Drop batch padding, back to row-major (B, 8) per head (fused by XLA under jit).
    out = out[:, :B].T
    return out[:, :8], out[:, 8:16], out[:, 16:24]


def init_params(key):
    """Deterministic init mimicking nn.Linear, stored in PyTorch (out, in) layout."""
    keys = jax.random.split(key, 8)

    def linear(kw, kb, fan_in, fan_out):
        bound = 1.0 / (fan_in ** 0.5)
        w = jax.random.uniform(kw, (fan_out, fan_in), jnp.float32, -bound, bound)
        b = jax.random.uniform(kb, (fan_out,), jnp.float32, -bound, bound)
        return w, b

    w1, b1 = linear(keys[0], keys[1], 8, 16)
    wO, bO = linear(keys[2], keys[3], 16, 8)
    wOm, bOm = linear(keys[4], keys[5], 16, 8)
    wTh, bTh = linear(keys[6], keys[7], 16, 8)
    return {"w1": w1, "b1": b1,
            "wO": wO, "bO": bO,
            "wOm": wOm, "bOm": bOm,
            "wTh": wTh, "bTh": bTh}


def reference(x, p):
    """Plain-JAX reference for the same forward pass."""
    h = jnp.maximum(x @ p["w1"].T + p["b1"], 0.0)
    return (h @ p["wO"].T + p["bO"],
            h @ p["wOm"].T + p["bOm"],
            h @ p["wTh"].T + p["bTh"])


if __name__ == "__main__":
    key = jax.random.PRNGKey(0)
    k_x, k_p = jax.random.split(key)

    batch = 2
    x = jax.random.normal(k_x, (batch, 8), dtype=jnp.float32)
    params = init_params(k_p)

    out_O, out_omega, out_theta = multi_complexity_net(x, params)
    jax.block_until_ready((out_O, out_omega, out_theta))

    # Sanity check against pure-JAX reference.
    ref_O, ref_om, ref_th = reference(x, params)
    assert out_O.shape == (batch, 8)
    assert out_omega.shape == (batch, 8)
    assert out_theta.shape == (batch, 8)
    assert jnp.allclose(out_O, ref_O, atol=1e-5)
    assert jnp.allclose(out_omega, ref_om, atol=1e-5)
    assert jnp.allclose(out_theta, ref_th, atol=1e-5)

    print("KERNEL_OK")
</pallas_src>

<mosaic_0001>
module attributes {stable_mosaic.version = 11 : i64} {
  func.func @_mcn_kernel(%arg0: i32, %arg1: memref<8x128xf32, #tpu.memory_space<vmem>>, %arg2: memref<16x8xf32, #tpu.memory_space<vmem>>, %arg3: memref<16x1xf32, #tpu.memory_space<vmem>>, %arg4: memref<24x16xf32, #tpu.memory_space<vmem>>, %arg5: memref<24x1xf32, #tpu.memory_space<vmem>>, %arg6: memref<24x128xf32, #tpu.memory_space<vmem>>) attributes {dimension_semantics = [#tpu.dimension_semantics<parallel>], iteration_bounds = array<i64: 1>, scalar_prefetch = 0 : i64, scratch_operands = 0 : i64, tpu.core_type = #tpu.core_type<tc>, window_params = [{transform_indices = @transform_0, window_bounds = array<i64: 8, 128>}, {pipeline_mode = #tpu.pipeline_mode<synchronous>, transform_indices = @transform_1, window_bounds = array<i64: 16, 8>}, {pipeline_mode = #tpu.pipeline_mode<synchronous>, transform_indices = @transform_2, window_bounds = array<i64: 16, 1>}, {pipeline_mode = #tpu.pipeline_mode<synchronous>, transform_indices = @transform_3, window_bounds = array<i64: 24, 16>}, {pipeline_mode = #tpu.pipeline_mode<synchronous>, transform_indices = @transform_4, window_bounds = array<i64: 24, 1>}, {transform_indices = @transform_5, window_bounds = array<i64: 24, 128>}]} {
    %c0 = arith.constant 0 : index
    %c0_0 = arith.constant 0 : index
    %0 = vector.load %arg2[%c0, %c0_0] : memref<16x8xf32, #tpu.memory_space<vmem>>, vector<16x8xf32>
    %c0_1 = arith.constant 0 : index
    %c0_2 = arith.constant 0 : index
    %1 = vector.load %arg1[%c0_1, %c0_2] : memref<8x128xf32, #tpu.memory_space<vmem>>, vector<8x128xf32>
    %cst = arith.constant dense<0.000000e+00> : vector<16x128xf32>
    %2 = tpu.matmul %0, %1, %cst {dimension_numbers = #tpu.dot_dimension_numbers<[1], [0], [0], [1], [0, 0, 1, 1], [], []>} : vector<16x8xf32>, vector<8x128xf32>, vector<16x128xf32> -> vector<16x128xf32>
    %c0_3 = arith.constant 0 : index
    %c0_4 = arith.constant 0 : index
    %3 = vector.load %arg3[%c0_3, %c0_4] : memref<16x1xf32, #tpu.memory_space<vmem>>, vector<16x1xf32>
    %4 = vector.broadcast %3 : vector<16x1xf32> to vector<16x128xf32>
    %5 = arith.addf %2, %4 : vector<16x128xf32>
    %cst_5 = arith.constant 0.000000e+00 : f32
    %6 = vector.broadcast %cst_5 : f32 to vector<16x128xf32>
    %7 = arith.maximumf %5, %6 : vector<16x128xf32>
    %c0_6 = arith.constant 0 : index
    %c0_7 = arith.constant 0 : index
    %8 = vector.load %arg4[%c0_6, %c0_7] : memref<24x16xf32, #tpu.memory_space<vmem>>, vector<24x16xf32>
    %cst_8 = arith.constant dense<0.000000e+00> : vector<24x128xf32>
    %9 = tpu.matmul %8, %7, %cst_8 {dimension_numbers = #tpu.dot_dimension_numbers<[1], [0], [0], [1], [0, 0, 1, 1], [], []>} : vector<24x16xf32>, vector<16x128xf32>, vector<24x128xf32> -> vector<24x128xf32>
    %c0_9 = arith.constant 0 : index
    %c0_10 = arith.constant 0 : index
    %10 = vector.load %arg5[%c0_9, %c0_10] : memref<24x1xf32, #tpu.memory_space<vmem>>, vector<24x1xf32>
    %11 = vector.broadcast %10 : vector<24x1xf32> to vector<24x128xf32>
    %12 = arith.addf %9, %11 : vector<24x128xf32>
    %c0_11 = arith.constant 0 : index
    %c0_12 = arith.constant 0 : index
    %13 = vector.load %arg6[%c0_11, %c0_12] : memref<24x128xf32, #tpu.memory_space<vmem>>, vector<24x128xf32>
    tpu.vector_store %arg6[%c0_11, %c0_12], %12 {strides = array<i32>} : memref<24x128xf32, #tpu.memory_space<vmem>>, vector<24x128xf32>,
    return
  }
  func.func @transform_0(%arg0: i32) -> (i32, i32) {
    %c0_i32 = arith.constant 0 : i32
    %c0_i32_0 = arith.constant 0 : i32
    return %c0_i32, %arg0 : i32, i32
  }
  func.func @transform_1(%arg0: i32) -> (i32, i32) {
    %c0_i32 = arith.constant 0 : i32
    %c0_i32_0 = arith.constant 0 : i32
    %c0_i32_1 = arith.constant 0 : i32
    return %c0_i32, %c0_i32_0 : i32, i32
  }
  func.func @transform_2(%arg0: i32) -> (i32, i32) {
    %c0_i32 = arith.constant 0 : i32
    %c0_i32_0 = arith.constant 0 : i32
    %c0_i32_1 = arith.constant 0 : i32
    return %c0_i32, %c0_i32_0 : i32, i32
  }
  func.func @transform_3(%arg0: i32) -> (i32, i32) {
    %c0_i32 = arith.constant 0 : i32
    %c0_i32_0 = arith.constant 0 : i32
    %c0_i32_1 = arith.constant 0 : i32
    return %c0_i32, %c0_i32_0 : i32, i32
  }
  func.func @transform_4(%arg0: i32) -> (i32, i32) {
    %c0_i32 = arith.constant 0 : i32
    %c0_i32_0 = arith.constant 0 : i32
    %c0_i32_1 = arith.constant 0 : i32
    return %c0_i32, %c0_i32_0 : i32, i32
  }
  func.func @transform_5(%arg0: i32) -> (i32, i32) {
    %c0_i32 = arith.constant 0 : i32
    %c0_i32_0 = arith.constant 0 : i32
    return %c0_i32, %arg0 : i32, i32
  }
}

</mosaic_0001>

<llo_original>
// kernel: multi_complexity_net.1
$region0: #{multi_complexity_net.1}
  #allocation0 [shape = 'u32[]', space=smem, size = 0x4, offset = 0x4, fixed_abs, tag = 'smem constant byte address 0x4 - core index']
  #allocation1 [shape = 'u32[144,128]{1,0:T(1,128)}', space=vmem, size = 0x12000, scoped, tag = 'internal scratch']
  %s0 = inlined_call_operand.vmem [shape: f32[8,128], index: 0, kind: input, shape index: {}]
  %s1 = inlined_call_operand.vmem [shape: f32[16,8], index: 1, kind: input, shape index: {}]
  %s2 = inlined_call_operand.vmem [shape: f32[16,1], index: 2, kind: input, shape index: {}]
  %s3 = inlined_call_operand.vmem [shape: f32[24,16], index: 3, kind: input, shape index: {}]
  %s4 = inlined_call_operand.vmem [shape: f32[24,1], index: 4, kind: input, shape index: {}]
  %s5 = inlined_call_operand.vmem [shape: f32[24,128], index: 5, kind: output, shape index: {}]
  %s6 = sld [smem:[#allocation0]]
  $region30: #{multi_complexity_net.1} parent=0
    _
  %s8 = ssub.s32 1, %s6
  %s9 = scalar_select 0, %s8, %s6
  // Predicated region
  $region2: #{multi_complexity_net.1} parent=0 // pred_check
    _
  $region3: #{multi_complexity_net.1} parent=0 // pred_check_branch
    %11 = sbr.rel (0) target = $region5
  $region4: #{multi_complexity_net.1} parent=0 // pred_region
    _
  $region5: #{multi_complexity_net.1} parent=0 // pred_fallthru
    _
  // Predicated region
  $region6: #{multi_complexity_net.1} parent=0 // pred_check
    _
  $region7: #{multi_complexity_net.1} parent=0 // pred_check_branch
    %13 = sbr.rel (0) target = $region9
  $region8: #{multi_complexity_net.1} parent=0 // pred_region
    _
  $region9: #{multi_complexity_net.1} parent=0 // pred_fallthru
    _
  // Predicated region
  $region10: #{multi_complexity_net.1} parent=0 // pred_check
    _
  $region11: #{multi_complexity_net.1} parent=0 // pred_check_branch
    %15 = sbr.rel (0) target = $region13
  $region12: #{multi_complexity_net.1} parent=0 // pred_region
    _
  $region13: #{multi_complexity_net.1} parent=0 // pred_fallthru
    _
  // Predicated region
  $region14: #{multi_complexity_net.1} parent=0 // pred_check
    _
  $region15: #{multi_complexity_net.1} parent=0 // pred_check_branch
    %17 = sbr.rel (0) target = $region17
  $region16: #{multi_complexity_net.1} parent=0 // pred_region
    _
  $region17: #{multi_complexity_net.1} parent=0 // pred_fallthru
    _
  // Predicated region
  $region18: #{multi_complexity_net.1} parent=0 // pred_check
    _
  $region19: #{multi_complexity_net.1} parent=0 // pred_check_branch
    %19 = sbr.rel (0) target = $region21
  $region20: #{multi_complexity_net.1} parent=0 // pred_region
    _
  $region21: #{multi_complexity_net.1} parent=0 // pred_fallthru
    _
  %v20 = vld [vmem:[%s1] sm:$0xff]
  %v21 = vld [vmem:[%s1 + $0x8] sm:$0xff]
  %v22 = vld [vmem:[%s0] sm:$0xff]
  %v23 = vld [vmem:[%s2] sm:$0xff]
  %v24 = vld [vmem:[%s2 + $0x8] sm:$0xff]
  %26 = vset.pattern.permute.xlu0 0
  %27 = vperm.xlu0 %26, %v23
  %v28 = vpop.permute.xlu0 %27
  %31 = vset.pattern.permute.xlu0 0
  %32 = vperm.xlu0 %31, %v24
  %v33 = vpop.permute.xlu0 %32
  %vm35 = vcmask 64512
  %v37 = vsel %vm35, %v20, 0
  %v40 = vsel %vm35, %v21, 0
  %42 = vmatprep.subr.mxu0 0.0
  %43 = vmatpush1.msra.mxu0 %v22
  %44 = vmatprep.subr.mxu0 0.0
  %45 = vmatpush1.msra.mxu0 0.0
  %46 = vmatprep.subr.mxu0 0.0
  %47 = vmatpush1.msra.mxu0 0.0
  %48 = vmatprep.subr.mxu0 0.0
  %49 = vmatpush1.msra.mxu0 0.0
  %50 = vmatprep.subr.mxu0 0.0
  %51 = vmatpush1.msra.mxu0 0.0
  %52 = vmatprep.subr.mxu0 0.0
  %53 = vmatpush1.msra.mxu0 0.0
  %54 = vmatprep.subr.mxu0 0.0
  %55 = vmatpush1.msra.mxu0 0.0
  %56 = vmatprep.subr.mxu0 0.0
  %57 = vmatpush1.msra.mxu0 0.0
  %58 = vmatprep.subr.mxu0 0.0
  %59 = vmatpush1.msra.mxu0 0.0
  %60 = vmatprep.subr.mxu0 0.0
  %61 = vmatpush1.msra.mxu0 0.0
  %62 = vmatprep.subr.mxu0 0.0
  %63 = vmatpush1.msra.mxu0 0.0
  %64 = vmatprep.subr.mxu0 0.0
  %65 = vmatpush1.msra.mxu0 0.0
  %66 = vmatprep.subr.mxu0 0.0
  %67 = vmatpush1.msra.mxu0 0.0
  %68 = vmatprep.subr.mxu0 0.0
  %69 = vmatpush1.msra.mxu0 0.0
  %70 = vmatprep.subr.mxu0 0.0
  %71 = vmatpush1.msra.mxu0 0.0
  %72 = vmatprep.subr.mxu0 0.0
  %73 = vmatpush1.msra.mxu0 0.0
  %74 = vmatprep.subr.mxu0 0.0
  %75 = vmatpush1.msra.mxu0 0.0
  %76 = vmatprep.subr.mxu0 0.0
  %77 = vmatpush1.msra.mxu0 0.0
  %78 = vmatprep.subr.mxu0 0.0
  %79 = vmatpush1.msra.mxu0 0.0
  %80 = vmatprep.subr.mxu0 0.0
  %81 = vmatpush1.msra.mxu0 0.0
  %82 = vmatprep.subr.mxu0 0.0
  %83 = vmatpush1.msra.mxu0 0.0
  %84 = vmatprep.subr.mxu0 0.0
  %85 = vmatpush1.msra.mxu0 0.0
  %86 = vmatprep.subr.mxu0 0.0
  %87 = vmatpush1.msra.mxu0 0.0
  %88 = vmatprep.subr.mxu0 0.0
  %89 = vmatpush1.msra.mxu0 0.0
  %90 = vmatprep.subr.mxu0 0.0
  %91 = vmatpush1.msra.mxu0 0.0
  %92 = vmatprep.subr.mxu0 0.0
  %93 = vmatpush1.msra.mxu0 0.0
  %94 = vmatprep.subr.mxu0 0.0
  %95 = vmatpush1.msra.mxu0 0.0
  %96 = vmatprep.subr.mxu0 0.0
  %97 = vmatpush1.msra.mxu0 0.0
  %98 = vmatprep.subr.mxu0 0.0
  %99 = vmatpush1.msra.mxu0 0.0
  %100 = vmatprep.subr.mxu0 0.0
  %101 = vmatpush1.msra.mxu0 0.0
  %102 = vmatprep.subr.mxu0 0.0
  %103 = vmatpush1.msra.mxu0 0.0
  %104 = vmatprep.subr.mxu0 0.0
  %105 = vmatpush1.msra.mxu0 0.0
  %106 = vmatprep.mubr.f32.mxu0 0.0
  %107 = vmatmul.mubr.f32.gmra.mrb[0].mxu0 %v37
  %v108 = vpop.f32.mrb[0].mxu0
  %v109 = vadd.f32 %v28, %v108
  %v110 = vpop.f32.mrb[0].mxu0
  %111 = vmatprep.mubr.f32.mxu0 0.0
  %112 = vmatmul.mubr.f32.gmra.mrb[0].mxu0 %v40
  %v113 = vpop.f32.mrb[0].mxu0
  %v114 = vadd.f32 %v33, %v113
  %v115 = vpop.f32.mrb[0].mxu0
  %116 = vdwg.mxu0
  %v117 = vmax.f32 %v109, 0.0
  %v118 = vmax.f32 %v114, 0.0
  %v119 = vld [vmem:[%s3] sm:$0xff]
  %v120 = vld [vmem:[%s3 + $0x8] sm:$0xff]
  %v121 = vld [vmem:[%s3 + $0x10] sm:$0xff]
  %v122 = vld [vmem:[%s4] sm:$0xff]
  %v123 = vld [vmem:[%s4 + $0x8] sm:$0xff]
  %v124 = vld [vmem:[%s4 + $0x10] sm:$0xff]
  %126 = vset.pattern.permute.xlu0 0
  %127 = vperm.xlu0 %126, %v122
  %v128 = vpop.permute.xlu0 %127
  %131 = vset.pattern.permute.xlu0 0
  %132 = vperm.xlu0 %131, %v123
  %v133 = vpop.permute.xlu0 %132
  %136 = vset.pattern.permute.xlu0 0
  %137 = vperm.xlu0 %136, %v124
  %v138 = vpop.permute.xlu0 %137
  %vm140 = vcmask 130048
  %v142 = vsel %vm140, %v119, 0
  %v145 = vsel %vm140, %v120, 0
  %v148 = vsel %vm140, %v121, 0
  %150 = vmatprep.subr.mxu0 0.0
  %151 = vmatpush1.msra.mxu0 %v117
  %152 = vmatprep.subr.mxu0 0.0
  %153 = vmatpush1.msra.mxu0 %v118
  %154 = vmatprep.subr.mxu0 0.0
  %155 = vmatpush1.msra.mxu0 0.0
  %156 = vmatprep.subr.mxu0 0.0
  %157 = vmatpush1.msra.mxu0 0.0
  %158 = vmatprep.subr.mxu0 0.0
  %159 = vmatpush1.msra.mxu0 0.0
  %160 = vmatprep.subr.mxu0 0.0
  %161 = vmatpush1.msra.mxu0 0.0
  %162 = vmatprep.subr.mxu0 0.0
  %163 = vmatpush1.msra.mxu0 0.0
  %164 = vmatprep.subr.mxu0 0.0
  %165 = vmatpush1.msra.mxu0 0.0
  %166 = vmatprep.subr.mxu0 0.0
  %167 = vmatpush1.msra.mxu0 0.0
  %168 = vmatprep.subr.mxu0 0.0
  %169 = vmatpush1.msra.mxu0 0.0
  %170 = vmatprep.subr.mxu0 0.0
  %171 = vmatpush1.msra.mxu0 0.0
  %172 = vmatprep.subr.mxu0 0.0
  %173 = vmatpush1.msra.mxu0 0.0
  %174 = vmatprep.subr.mxu0 0.0
  %175 = vmatpush1.msra.mxu0 0.0
  %176 = vmatprep.subr.mxu0 0.0
  %177 = vmatpush1.msra.mxu0 0.0
  %178 = vmatprep.subr.mxu0 0.0
  %179 = vmatpush1.msra.mxu0 0.0
  %180 = vmatprep.subr.mxu0 0.0
  %181 = vmatpush1.msra.mxu0 0.0
  %182 = vmatprep.subr.mxu0 0.0
  %183 = vmatpush1.msra.mxu0 0.0
  %184 = vmatprep.subr.mxu0 0.0
  %185 = vmatpush1.msra.mxu0 0.0
  %186 = vmatprep.subr.mxu0 0.0
  %187 = vmatpush1.msra.mxu0 0.0
  %188 = vmatprep.subr.mxu0 0.0
  %189 = vmatpush1.msra.mxu0 0.0
  %190 = vmatprep.subr.mxu0 0.0
  %191 = vmatpush1.msra.mxu0 0.0
  %192 = vmatprep.subr.mxu0 0.0
  %193 = vmatpush1.msra.mxu0 0.0
  %194 = vmatprep.subr.mxu0 0.0
  %195 = vmatpush1.msra.mxu0 0.0
  %196 = vmatprep.subr.mxu0 0.0
  %197 = vmatpush1.msra.mxu0 0.0
  %198 = vmatprep.subr.mxu0 0.0
  %199 = vmatpush1.msra.mxu0 0.0
  %200 = vmatprep.subr.mxu0 0.0
  %201 = vmatpush1.msra.mxu0 0.0
  %202 = vmatprep.subr.mxu0 0.0
  %203 = vmatpush1.msra.mxu0 0.0
  %204 = vmatprep.subr.mxu0 0.0
  %205 = vmatpush1.msra.mxu0 0.0
  %206 = vmatprep.subr.mxu0 0.0
  %207 = vmatpush1.msra.mxu0 0.0
  %208 = vmatprep.subr.mxu0 0.0
  %209 = vmatpush1.msra.mxu0 0.0
  %210 = vmatprep.subr.mxu0 0.0
  %211 = vmatpush1.msra.mxu0 0.0
  %212 = vmatprep.subr.mxu0 0.0
  %213 = vmatpush1.msra.mxu0 0.0
  %214 = vmatprep.mubr.f32.mxu0 0.0
  %215 = vmatmul.mubr.f32.gmra.mrb[0].mxu0 %v142
  %v216 = vpop.f32.mrb[0].mxu0
  %v217 = vadd.f32 %v128, %v216
  %v218 = vpop.f32.mrb[0].mxu0
  %219 = vmatprep.mubr.f32.mxu0 0.0
  %220 = vmatmul.mubr.f32.gmra.mrb[0].mxu0 %v145
  %v221 = vpop.f32.mrb[0].mxu0
  %v222 = vadd.f32 %v133, %v221
  %v223 = vpop.f32.mrb[0].mxu0
  %224 = vmatprep.mubr.f32.mxu0 0.0
  %225 = vmatmul.mubr.f32.gmra.mrb[0].mxu0 %v148
  %v226 = vpop.f32.mrb[0].mxu0
  %v227 = vadd.f32 %v138, %v226
  %v228 = vpop.f32.mrb[0].mxu0
  %229 = vdwg.mxu0
  %230 = vst [vmem:[%s5] sm:$0xff] %v217
  %231 = vst [vmem:[%s5 + $0x8] sm:$0xff] %v222
  %232 = vst [vmem:[%s5 + $0x10] sm:$0xff] %v227
  // Predicated region
  $region22: #{multi_complexity_net.1} parent=0 // pred_check
    _
  $region23: #{multi_complexity_net.1} parent=0 // pred_check_branch
    %234 = sbr.rel (0) target = $region25
  $region24: #{multi_complexity_net.1} parent=0 // pred_region
    _
  $region25: #{multi_complexity_net.1} parent=0 // pred_fallthru
    _
  // Predicated region
  $region26: #{multi_complexity_net.1} parent=0 // pred_check
    _
  $region27: #{multi_complexity_net.1} parent=0 // pred_check_branch
    %236 = sbr.rel (0) target = $region29
  $region28: #{multi_complexity_net.1} parent=0 // pred_region
    _
  $region29: #{multi_complexity_net.1} parent=0 // pred_fallthru
    _

</llo_original>
